<compile_context>
chip_gen: v7x
topology: tpu7x:2x2x1
jax: 0.10.0
libtpu: 0.0.40
codegen_flags: <defaults>
</compile_context>

<pallas_src>
import functools

import jax
import jax.numpy as jnp
from jax.experimental import pallas as pl
from jax.experimental.pallas import tpu as pltpu


def lstm_block_kernel(x_ref, wih_ref, whh_ref, b_ref, out_ref, cn_ref,
                      h_scr, c_scr):
    """Process one block of TT timesteps.  Grid axis 0 == time blocks (serial).

    x_ref   : (TT, B, D)   inputs for this time block (bf16 or f32)
    wih_ref : (D, 4H)      fused input->gate weights, gate order (i, f, g, o)
    whh_ref : (H, 4H)      fused hidden->gate weights
    b_ref   : (1, 4H)      combined bias (b_ih + b_hh), f32
    out_ref : (TT, B, H)   hidden states for this time block, f32
    cn_ref  : (B, H)       final cell state (resident; last write wins), f32
    h_scr   : (B, H)       persistent hidden state (VMEM scratch), f32
    c_scr   : (B, H)       persistent cell state  (VMEM scratch), f32
    """
    tb = pl.program_id(0)

    @pl.when(tb == 0)
    def _():
        h_scr[...] = jnp.zeros_like(h_scr)
        c_scr[...] = jnp.zeros_like(c_scr)

    TT, B, D = x_ref.shape
    H = whh_ref.shape[0]

    # Hoisted input projection: one lane-dense (TT*B, D) x (D, 4H) MXU matmul
    # for the whole block (no recurrent dependency); bias folded in once.
    x_all = x_ref[...].reshape(TT * B, D)
    xp = (jnp.dot(x_all, wih_ref[...], preferred_element_type=jnp.float32)
          + b_ref[...]).reshape(TT, B, 4 * H)

    # Hoist invariant loads out of the serial loop.
    whh = whh_ref[...]
    h = h_scr[...]
    c = c_scr[...]

    # Serial recurrence over the time block (fully unrolled, static indices).
    for t in range(TT):
        gates = xp[t] + jnp.dot(h.astype(whh.dtype), whh,
                                preferred_element_type=jnp.float32)  # (B, 4H)
        i_g = jax.nn.sigmoid(gates[:, 0 * H:1 * H])
        f_g = jax.nn.sigmoid(gates[:, 1 * H:2 * H])
        g_g = jnp.tanh(gates[:, 2 * H:3 * H])
        o_g = jax.nn.sigmoid(gates[:, 3 * H:4 * H])
        c = f_g * c + i_g * g_g
        h = o_g * jnp.tanh(c)
        out_ref[t] = h.astype(out_ref.dtype)

    h_scr[...] = h
    c_scr[...] = c
    cn_ref[...] = c.astype(cn_ref.dtype)


@functools.partial(jax.jit, static_argnames=("time_block",))
def lstm_forward(emb, w_ih, w_hh, b, *, time_block=None):
    """Equivalent of RNN_Classifier.forward(input, hidden=None) for LSTM.

    emb : (T, B, D) float32.  w_ih : (D, 4H), w_hh : (H, 4H) (bf16 preferred),
    b : (1, 4H) float32 (= b_ih + b_hh).  Returns (out, (h_n, c_n)).
    """
    T, B, D = emb.shape
    H = w_hh.shape[0]
    compute_dtype = w_ih.dtype

    # Pad batch to a sublane multiple (>= 8) so vector ops / stores are dense.
    B_pad = max(8, ((B + 7) // 8) * 8)
    if B_pad != B:
        emb = jnp.pad(emb, ((0, 0), (0, B_pad - B), (0, 0)))
    emb = emb.astype(compute_dtype)

    tt = T if time_block is None else time_block
    assert T % tt == 0, "time_block must divide T"
    grid = (T // tt,)

    out, c_n = pl.pallas_call(
        lstm_block_kernel,
        out_shape=(
            jax.ShapeDtypeStruct((T, B_pad, H), jnp.float32),
            jax.ShapeDtypeStruct((B_pad, H), jnp.float32),
        ),
        grid_spec=pltpu.PrefetchScalarGridSpec(
            num_scalar_prefetch=0,
            grid=grid,
            in_specs=[
                pl.BlockSpec((tt, B_pad, D), lambda i: (i, 0, 0)),
                pl.BlockSpec((D, 4 * H), lambda i: (0, 0)),
                pl.BlockSpec((H, 4 * H), lambda i: (0, 0)),
                pl.BlockSpec((1, 4 * H), lambda i: (0, 0)),
            ],
            out_specs=(
                pl.BlockSpec((tt, B_pad, H), lambda i: (i, 0, 0)),
                pl.BlockSpec((B_pad, H), lambda i: (0, 0)),
            ),
            scratch_shapes=[
                pltpu.VMEM((B_pad, H), jnp.float32),   # h state
                pltpu.VMEM((B_pad, H), jnp.float32),   # c state
            ],
        ),
        compiler_params=pltpu.CompilerParams(
            dimension_semantics=("arbitrary",)),       # time is serial
    )(emb, w_ih, w_hh, b)

    out = out[:, :B, :]
    h_n = out[-1][None]          # (1, B, H) — single layer, unidirectional
    c_n = c_n[:B][None]          # (1, B, H)
    return out, (h_n, c_n)


def init_lstm_params(key, d_input, hidden_size, compute_dtype=jnp.bfloat16):
    """PyTorch nn.LSTM default init: U(-k, k), k = 1/sqrt(H), gate order i,f,g,o.
    Stored fused + transposed: w_ih:(D,4H), w_hh:(H,4H), b:(1,4H)=b_ih+b_hh."""
    H, D = hidden_size, d_input
    k = 1.0 / jnp.sqrt(jnp.float32(H))
    k1, k2, k3, k4 = jax.random.split(key, 4)
    w_ih_pt = jax.random.uniform(k1, (4 * H, D), jnp.float32, -k, k)
    w_hh_pt = jax.random.uniform(k2, (4 * H, H), jnp.float32, -k, k)
    b_ih = jax.random.uniform(k3, (4 * H,), jnp.float32, -k, k)
    b_hh = jax.random.uniform(k4, (4 * H,), jnp.float32, -k, k)
    return {
        "w_ih": w_ih_pt.T.astype(compute_dtype),     # (D, 4H)
        "w_hh": w_hh_pt.T.astype(compute_dtype),     # (H, 4H)
        "b": (b_ih + b_hh)[None, :],                 # (1, 4H) f32
    }


def lstm_reference(emb, w_ih, w_hh, b):
    """Pure-JAX LSTM with the same bf16-matmul / f32-accumulate numerics."""
    compute_dtype = w_ih.dtype
    T, B, D = emb.shape
    H = w_hh.shape[0]
    emb_c = emb.astype(compute_dtype)

    def step(carry, x_t):
        h, c = carry
        gates = (jnp.dot(x_t, w_ih, preferred_element_type=jnp.float32) + b
                 + jnp.dot(h.astype(compute_dtype), w_hh,
                           preferred_element_type=jnp.float32))
        i_g = jax.nn.sigmoid(gates[:, 0 * H:1 * H])
        f_g = jax.nn.sigmoid(gates[:, 1 * H:2 * H])
        g_g = jnp.tanh(gates[:, 2 * H:3 * H])
        o_g = jax.nn.sigmoid(gates[:, 3 * H:4 * H])
        c_new = f_g * c + i_g * g_g
        h_new = o_g * jnp.tanh(c_new)
        return (h_new, c_new), h_new

    init = (jnp.zeros((B, H), jnp.float32), jnp.zeros((B, H), jnp.float32))
    (h_T, c_T), outs = jax.lax.scan(step, init, emb_c)
    return outs, (h_T[None], c_T[None])


if __name__ == "__main__":
    # Small shapes consistent with the module: seq T=8, batch B=2,
    # d_input D=32, hidden_size H=32 (fused gate dim 4H = 128 lanes).
    T, B, D, H = 8, 2, 32, 32

    key = jax.random.PRNGKey(0)
    k_emb, k_par = jax.random.split(key)
    emb = jax.random.normal(k_emb, (T, B, D), dtype=jnp.float32)
    params = init_lstm_params(k_par, D, H, compute_dtype=jnp.bfloat16)

    out, (h_n, c_n) = lstm_forward(emb, params["w_ih"], params["w_hh"],
                                   params["b"])
    out = jax.block_until_ready(out)
    c_n = jax.block_until_ready(c_n)

    # Correctness check against a pure-JAX reference with matching numerics.
    ref_out, (ref_h, ref_c) = lstm_reference(emb, params["w_ih"],
                                             params["w_hh"], params["b"])

    assert out.shape == (T, B, H)
    assert h_n.shape == (1, B, H) and c_n.shape == (1, B, H)
    assert jnp.allclose(out, ref_out, rtol=5e-4, atol=5e-4), \
        "LSTM output mismatch vs reference"
    assert jnp.allclose(h_n, ref_h, rtol=5e-4, atol=5e-4), \
        "h_n mismatch vs reference"
    assert jnp.allclose(c_n, ref_c, rtol=5e-4, atol=5e-4), \
        "c_n mismatch vs reference"

    print("KERNEL_OK")
</pallas_src>

<mosaic_0001>
module attributes {stable_mosaic.version = 11 : i64} {
  func.func @lstm_block_kernel(%arg0: i32, %arg1: memref<8x8x32xbf16, #tpu.memory_space<vmem>>, %arg2: memref<32x128xbf16, #tpu.memory_space<vmem>>, %arg3: memref<32x128xbf16, #tpu.memory_space<vmem>>, %arg4: memref<1x128xf32, #tpu.memory_space<vmem>>, %arg5: memref<8x8x32xf32, #tpu.memory_space<vmem>>, %arg6: memref<8x32xf32, #tpu.memory_space<vmem>>, %arg7: memref<8x32xf32, #tpu.memory_space<vmem>>, %arg8: memref<8x32xf32, #tpu.memory_space<vmem>>) attributes {dimension_semantics = [#tpu.dimension_semantics<arbitrary>], iteration_bounds = array<i64: 1>, scalar_prefetch = 0 : i64, scratch_operands = 2 : i64, tpu.core_type = #tpu.core_type<tc>, window_params = [{transform_indices = @transform_0, window_bounds = array<i64: 8, 8, 32>}, {pipeline_mode = #tpu.pipeline_mode<synchronous>, transform_indices = @transform_1, window_bounds = array<i64: 32, 128>}, {pipeline_mode = #tpu.pipeline_mode<synchronous>, transform_indices = @transform_2, window_bounds = array<i64: 32, 128>}, {pipeline_mode = #tpu.pipeline_mode<synchronous>, transform_indices = @transform_3, window_bounds = array<i64: 1, 128>}, {transform_indices = @transform_4, window_bounds = array<i64: 8, 8, 32>}, {pipeline_mode = #tpu.pipeline_mode<synchronous>, transform_indices = @transform_5, window_bounds = array<i64: 8, 32>}]} {
    %c0_i32 = arith.constant 0 : i32
    %0 = arith.cmpi eq, %arg0, %c0_i32 : i32
    %1 = arith.extui %0 : i1 to i32
    %c0_i32_0 = arith.constant 0 : i32
    %2 = arith.cmpi ne, %1, %c0_i32_0 : i32
    scf.if %2 {
      %cst_68 = arith.constant 0.000000e+00 : f32
      %281 = vector.broadcast %cst_68 : f32 to vector<8x32xf32>
      %c0_69 = arith.constant 0 : index
      %c0_70 = arith.constant 0 : index
      %282 = vector.load %arg7[%c0_69, %c0_70] : memref<8x32xf32, #tpu.memory_space<vmem>>, vector<8x32xf32>
      tpu.vector_store %arg7[%c0_69, %c0_70], %281 {strides = array<i32>} : memref<8x32xf32, #tpu.memory_space<vmem>>, vector<8x32xf32>,
      %cst_71 = arith.constant 0.000000e+00 : f32
      %283 = vector.broadcast %cst_71 : f32 to vector<8x32xf32>
      %c0_72 = arith.constant 0 : index
      %c0_73 = arith.constant 0 : index
      %284 = vector.load %arg8[%c0_72, %c0_73] : memref<8x32xf32, #tpu.memory_space<vmem>>, vector<8x32xf32>
      tpu.vector_store %arg8[%c0_72, %c0_73], %283 {strides = array<i32>} : memref<8x32xf32, #tpu.memory_space<vmem>>, vector<8x32xf32>,
    } else {
    }
    %c0 = arith.constant 0 : index
    %c0_1 = arith.constant 0 : index
    %c0_2 = arith.constant 0 : index
    %3 = vector.load %arg1[%c0, %c0_1, %c0_2] : memref<8x8x32xbf16, #tpu.memory_space<vmem>>, vector<8x8x32xbf16>
    %4 = vector.shape_cast %3 : vector<8x8x32xbf16> to vector<64x32xbf16>
    %c0_3 = arith.constant 0 : index
    %c0_4 = arith.constant 0 : index
    %5 = vector.load %arg2[%c0_3, %c0_4] : memref<32x128xbf16, #tpu.memory_space<vmem>>, vector<32x128xbf16>
    %cst = arith.constant dense<0.000000e+00> : vector<64x128xf32>
    %6 = tpu.matmul %4, %5, %cst {dimension_numbers = #tpu.dot_dimension_numbers<[1], [0], [0], [1], [0, 0, 1, 1], [], []>} : vector<64x32xbf16>, vector<32x128xbf16>, vector<64x128xf32> -> vector<64x128xf32>
    %c0_5 = arith.constant 0 : index
    %c0_6 = arith.constant 0 : index
    %7 = vector.load %arg4[%c0_5, %c0_6] : memref<1x128xf32, #tpu.memory_space<vmem>>, vector<1x128xf32>
    %8 = vector.broadcast %7 : vector<1x128xf32> to vector<64x128xf32>
    %9 = arith.addf %6, %8 : vector<64x128xf32>
    %10 = vector.shape_cast %9 : vector<64x128xf32> to vector<8x8x128xf32>
    %c0_7 = arith.constant 0 : index
    %c0_8 = arith.constant 0 : index
    %11 = vector.load %arg3[%c0_7, %c0_8] : memref<32x128xbf16, #tpu.memory_space<vmem>>, vector<32x128xbf16>
    %c0_9 = arith.constant 0 : index
    %c0_10 = arith.constant 0 : index
    %12 = vector.load %arg7[%c0_9, %c0_10] : memref<8x32xf32, #tpu.memory_space<vmem>>, vector<8x32xf32>
    %c0_11 = arith.constant 0 : index
    %c0_12 = arith.constant 0 : index
    %13 = vector.load %arg8[%c0_11, %c0_12] : memref<8x32xf32, #tpu.memory_space<vmem>>, vector<8x32xf32>
    %14 = vector.extract_strided_slice %10 {offsets = [0, 0, 0], sizes = [1, 8, 128], strides = [1, 1, 1]} : vector<8x8x128xf32> to vector<1x8x128xf32>
    %15 = vector.shape_cast %14 : vector<1x8x128xf32> to vector<8x128xf32>
    %16 = arith.truncf %12 : vector<8x32xf32> to vector<8x32xbf16>
    %cst_13 = arith.constant dense<0.000000e+00> : vector<8x128xf32>
    %17 = tpu.matmul %16, %11, %cst_13 {dimension_numbers = #tpu.dot_dimension_numbers<[1], [0], [0], [1], [0, 0, 1, 1], [], []>} : vector<8x32xbf16>, vector<32x128xbf16>, vector<8x128xf32> -> vector<8x128xf32>
    %18 = arith.addf %15, %17 : vector<8x128xf32>
    %19 = vector.extract_strided_slice %18 {offsets = [0, 0], sizes = [8, 32], strides = [1, 1]} : vector<8x128xf32> to vector<8x32xf32>
    %20 = arith.negf %19 : vector<8x32xf32>
    %21 = math.exp %20 : vector<8x32xf32>
    %cst_14 = arith.constant 1.000000e+00 : f32
    %22 = vector.broadcast %cst_14 : f32 to vector<8x32xf32>
    %23 = arith.addf %22, %21 : vector<8x32xf32>
    %24 = arith.divf %22, %23 : vector<8x32xf32>
    %25 = vector.extract_strided_slice %18 {offsets = [0, 32], sizes = [8, 32], strides = [1, 1]} : vector<8x128xf32> to vector<8x32xf32>
    %26 = arith.negf %25 : vector<8x32xf32>
    %27 = math.exp %26 : vector<8x32xf32>
    %cst_15 = arith.constant 1.000000e+00 : f32
    %28 = vector.broadcast %cst_15 : f32 to vector<8x32xf32>
    %29 = arith.addf %28, %27 : vector<8x32xf32>
    %30 = arith.divf %28, %29 : vector<8x32xf32>
    %31 = vector.extract_strided_slice %18 {offsets = [0, 64], sizes = [8, 32], strides = [1, 1]} : vector<8x128xf32> to vector<8x32xf32>
    %32 = math.tanh %31 : vector<8x32xf32>
    %33 = vector.extract_strided_slice %18 {offsets = [0, 96], sizes = [8, 32], strides = [1, 1]} : vector<8x128xf32> to vector<8x32xf32>
    %34 = arith.negf %33 : vector<8x32xf32>
    %35 = math.exp %34 : vector<8x32xf32>
    %cst_16 = arith.constant 1.000000e+00 : f32
    %36 = vector.broadcast %cst_16 : f32 to vector<8x32xf32>
    %37 = arith.addf %36, %35 : vector<8x32xf32>
    %38 = arith.divf %36, %37 : vector<8x32xf32>
    %39 = arith.mulf %30, %13 : vector<8x32xf32>
    %40 = arith.mulf %24, %32 : vector<8x32xf32>
    %41 = arith.addf %39, %40 : vector<8x32xf32>
    %42 = math.tanh %41 : vector<8x32xf32>
    %43 = arith.mulf %38, %42 : vector<8x32xf32>
    %c0_17 = arith.constant 0 : index
    %c0_18 = arith.constant 0 : index
    %c0_19 = arith.constant 0 : index
    %44 = vector.load %arg5[%c0_17, %c0_18, %c0_19] : memref<8x8x32xf32, #tpu.memory_space<vmem>>, vector<1x8x32xf32>
    %45 = vector.shape_cast %44 : vector<1x8x32xf32> to vector<8x32xf32>
    %46 = vector.shape_cast %43 : vector<8x32xf32> to vector<1x8x32xf32>
    tpu.vector_store %arg5[%c0_17, %c0_18, %c0_19], %46 {strides = array<i32>} : memref<8x8x32xf32, #tpu.memory_space<vmem>>, vector<1x8x32xf32>,
    %47 = vector.extract_strided_slice %10 {offsets = [1, 0, 0], sizes = [1, 8, 128], strides = [1, 1, 1]} : vector<8x8x128xf32> to vector<1x8x128xf32>
    %48 = vector.shape_cast %47 : vector<1x8x128xf32> to vector<8x128xf32>
    %49 = arith.truncf %43 : vector<8x32xf32> to vector<8x32xbf16>
    %cst_20 = arith.constant dense<0.000000e+00> : vector<8x128xf32>
    %50 = tpu.matmul %49, %11, %cst_20 {dimension_numbers = #tpu.dot_dimension_numbers<[1], [0], [0], [1], [0, 0, 1, 1], [], []>} : vector<8x32xbf16>, vector<32x128xbf16>, vector<8x128xf32> -> vector<8x128xf32>
    %51 = arith.addf %48, %50 : vector<8x128xf32>
    %52 = vector.extract_strided_slice %51 {offsets = [0, 0], sizes = [8, 32], strides = [1, 1]} : vector<8x128xf32> to vector<8x32xf32>
    %53 = arith.negf %52 : vector<8x32xf32>
    %54 = math.exp %53 : vector<8x32xf32>
    %cst_21 = arith.constant 1.000000e+00 : f32
    %55 = vector.broadcast %cst_21 : f32 to vector<8x32xf32>
    %56 = arith.addf %55, %54 : vector<8x32xf32>
    %57 = arith.divf %55, %56 : vector<8x32xf32>
    %58 = vector.extract_strided_slice %51 {offsets = [0, 32], sizes = [8, 32], strides = [1, 1]} : vector<8x128xf32> to vector<8x32xf32>
    %59 = arith.negf %58 : vector<8x32xf32>
    %60 = math.exp %59 : vector<8x32xf32>
    %cst_22 = arith.constant 1.000000e+00 : f32
    %61 = vector.broadcast %cst_22 : f32 to vector<8x32xf32>
    %62 = arith.addf %61, %60 : vector<8x32xf32>
    %63 = arith.divf %61, %62 : vector<8x32xf32>
    %64 = vector.extract_strided_slice %51 {offsets = [0, 64], sizes = [8, 32], strides = [1, 1]} : vector<8x128xf32> to vector<8x32xf32>
    %65 = math.tanh %64 : vector<8x32xf32>
    %66 = vector.extract_strided_slice %51 {offsets = [0, 96], sizes = [8, 32], strides = [1, 1]} : vector<8x128xf32> to vector<8x32xf32>
    %67 = arith.negf %66 : vector<8x32xf32>
    %68 = math.exp %67 : vector<8x32xf32>
    %cst_23 = arith.constant 1.000000e+00 : f32
    %69 = vector.broadcast %cst_23 : f32 to vector<8x32xf32>
    %70 = arith.addf %69, %68 : vector<8x32xf32>
    %71 = arith.divf %69, %70 : vector<8x32xf32>
    %72 = arith.mulf %63, %41 : vector<8x32xf32>
    %73 = arith.mulf %57, %65 : vector<8x32xf32>
    %74 = arith.addf %72, %73 : vector<8x32xf32>
    %75 = math.tanh %74 : vector<8x32xf32>
    %76 = arith.mulf %71, %75 : vector<8x32xf32>
    %c1 = arith.constant 1 : index
    %c0_24 = arith.constant 0 : index
    %c0_25 = arith.constant 0 : index
    %77 = vector.load %arg5[%c1, %c0_24, %c0_25] : memref<8x8x32xf32, #tpu.memory_space<vmem>>, vector<1x8x32xf32>
    %78 = vector.shape_cast %77 : vector<1x8x32xf32> to vector<8x32xf32>
    %79 = vector.shape_cast %76 : vector<8x32xf32> to vector<1x8x32xf32>
    tpu.vector_store %arg5[%c1, %c0_24, %c0_25], %79 {strides = array<i32>} : memref<8x8x32xf32, #tpu.memory_space<vmem>>, vector<1x8x32xf32>,
    %80 = vector.extract_strided_slice %10 {offsets = [2, 0, 0], sizes = [1, 8, 128], strides = [1, 1, 1]} : vector<8x8x128xf32> to vector<1x8x128xf32>
    %81 = vector.shape_cast %80 : vector<1x8x128xf32> to vector<8x128xf32>
    %82 = arith.truncf %76 : vector<8x32xf32> to vector<8x32xbf16>
    %cst_26 = arith.constant dense<0.000000e+00> : vector<8x128xf32>
    %83 = tpu.matmul %82, %11, %cst_26 {dimension_numbers = #tpu.dot_dimension_numbers<[1], [0], [0], [1], [0, 0, 1, 1], [], []>} : vector<8x32xbf16>, vector<32x128xbf16>, vector<8x128xf32> -> vector<8x128xf32>
    %84 = arith.addf %81, %83 : vector<8x128xf32>
    %85 = vector.extract_strided_slice %84 {offsets = [0, 0], sizes = [8, 32], strides = [1, 1]} : vector<8x128xf32> to vector<8x32xf32>
    %86 = arith.negf %85 : vector<8x32xf32>
    %87 = math.exp %86 : vector<8x32xf32>
    %cst_27 = arith.constant 1.000000e+00 : f32
    %88 = vector.broadcast %cst_27 : f32 to vector<8x32xf32>
    %89 = arith.addf %88, %87 : vector<8x32xf32>
    %90 = arith.divf %88, %89 : vector<8x32xf32>
    %91 = vector.extract_strided_slice %84 {offsets = [0, 32], sizes = [8, 32], strides = [1, 1]} : vector<8x128xf32> to vector<8x32xf32>
    %92 = arith.negf %91 : vector<8x32xf32>
    %93 = math.exp %92 : vector<8x32xf32>
    %cst_28 = arith.constant 1.000000e+00 : f32
    %94 = vector.broadcast %cst_28 : f32 to vector<8x32xf32>
    %95 = arith.addf %94, %93 : vector<8x32xf32>
    %96 = arith.divf %94, %95 : vector<8x32xf32>
    %97 = vector.extract_strided_slice %84 {offsets = [0, 64], sizes = [8, 32], strides = [1, 1]} : vector<8x128xf32> to vector<8x32xf32>
    %98 = math.tanh %97 : vector<8x32xf32>
    %99 = vector.extract_strided_slice %84 {offsets = [0, 96], sizes = [8, 32], strides = [1, 1]} : vector<8x128xf32> to vector<8x32xf32>
    %100 = arith.negf %99 : vector<8x32xf32>
    %101 = math.exp %100 : vector<8x32xf32>
    %cst_29 = arith.constant 1.000000e+00 : f32
    %102 = vector.broadcast %cst_29 : f32 to vector<8x32xf32>
    %103 = arith.addf %102, %101 : vector<8x32xf32>
    %104 = arith.divf %102, %103 : vector<8x32xf32>
    %105 = arith.mulf %96, %74 : vector<8x32xf32>
    %106 = arith.mulf %90, %98 : vector<8x32xf32>
    %107 = arith.addf %105, %106 : vector<8x32xf32>
    %108 = math.tanh %107 : vector<8x32xf32>
    %109 = arith.mulf %104, %108 : vector<8x32xf32>
    %c2 = arith.constant 2 : index
    %c0_30 = arith.constant 0 : index
    %c0_31 = arith.constant 0 : index
    %110 = vector.load %arg5[%c2, %c0_30, %c0_31] : memref<8x8x32xf32, #tpu.memory_space<vmem>>, vector<1x8x32xf32>
    %111 = vector.shape_cast %110 : vector<1x8x32xf32> to vector<8x32xf32>
    %112 = vector.shape_cast %109 : vector<8x32xf32> to vector<1x8x32xf32>
    tpu.vector_store %arg5[%c2, %c0_30, %c0_31], %112 {strides = array<i32>} : memref<8x8x32xf32, #tpu.memory_space<vmem>>, vector<1x8x32xf32>,
    %113 = vector.extract_strided_slice %10 {offsets = [3, 0, 0], sizes = [1, 8, 128], strides = [1, 1, 1]} : vector<8x8x128xf32> to vector<1x8x128xf32>
    %114 = vector.shape_cast %113 : vector<1x8x128xf32> to vector<8x128xf32>
    %115 = arith.truncf %109 : vector<8x32xf32> to vector<8x32xbf16>
    %cst_32 = arith.constant dense<0.000000e+00> : vector<8x128xf32>
    %116 = tpu.matmul %115, %11, %cst_32 {dimension_numbers = #tpu.dot_dimension_numbers<[1], [0], [0], [1], [0, 0, 1, 1], [], []>} : vector<8x32xbf16>, vector<32x128xbf16>, vector<8x128xf32> -> vector<8x128xf32>
    %117 = arith.addf %114, %116 : vector<8x128xf32>
    %118 = vector.extract_strided_slice %117 {offsets = [0, 0], sizes = [8, 32], strides = [1, 1]} : vector<8x128xf32> to vector<8x32xf32>
    %119 = arith.negf %118 : vector<8x32xf32>
    %120 = math.exp %119 : vector<8x32xf32>
    %cst_33 = arith.constant 1.000000e+00 : f32
    %121 = vector.broadcast %cst_33 : f32 to vector<8x32xf32>
    %122 = arith.addf %121, %120 : vector<8x32xf32>
    %123 = arith.divf %121, %122 : vector<8x32xf32>
    %124 = vector.extract_strided_slice %117 {offsets = [0, 32], sizes = [8, 32], strides = [1, 1]} : vector<8x128xf32> to vector<8x32xf32>
    %125 = arith.negf %124 : vector<8x32xf32>
    %126 = math.exp %125 : vector<8x32xf32>
    %cst_34 = arith.constant 1.000000e+00 : f32
    %127 = vector.broadcast %cst_34 : f32 to vector<8x32xf32>
    %128 = arith.addf %127, %126 : vector<8x32xf32>
    %129 = arith.divf %127, %128 : vector<8x32xf32>
    %130 = vector.extract_strided_slice %117 {offsets = [0, 64], sizes = [8, 32], strides = [1, 1]} : vector<8x128xf32> to vector<8x32xf32>
    %131 = math.tanh %130 : vector<8x32xf32>
    %132 = vector.extract_strided_slice %117 {offsets = [0, 96], sizes = [8, 32], strides = [1, 1]} : vector<8x128xf32> to vector<8x32xf32>
    %133 = arith.negf %132 : vector<8x32xf32>
    %134 = math.exp %133 : vector<8x32xf32>
    %cst_35 = arith.constant 1.000000e+00 : f32
    %135 = vector.broadcast %cst_35 : f32 to vector<8x32xf32>
    %136 = arith.addf %135, %134 : vector<8x32xf32>
    %137 = arith.divf %135, %136 : vector<8x32xf32>
    %138 = arith.mulf %129, %107 : vector<8x32xf32>
    %139 = arith.mulf %123, %131 : vector<8x32xf32>
    %140 = arith.addf %138, %139 : vector<8x32xf32>
    %141 = math.tanh %140 : vector<8x32xf32>
    %142 = arith.mulf %137, %141 : vector<8x32xf32>
    %c3 = arith.constant 3 : index
    %c0_36 = arith.constant 0 : index
    %c0_37 = arith.constant 0 : index
    %143 = vector.load %arg5[%c3, %c0_36, %c0_37] : memref<8x8x32xf32, #tpu.memory_space<vmem>>, vector<1x8x32xf32>
    %144 = vector.shape_cast %143 : vector<1x8x32xf32> to vector<8x32xf32>
    %145 = vector.shape_cast %142 : vector<8x32xf32> to vector<1x8x32xf32>
    tpu.vector_store %arg5[%c3, %c0_36, %c0_37], %145 {strides = array<i32>} : memref<8x8x32xf32, #tpu.memory_space<vmem>>, vector<1x8x32xf32>,
    %146 = vector.extract_strided_slice %10 {offsets = [4, 0, 0], sizes = [1, 8, 128], strides = [1, 1, 1]} : vector<8x8x128xf32> to vector<1x8x128xf32>
    %147 = vector.shape_cast %146 : vector<1x8x128xf32> to vector<8x128xf32>
    %148 = arith.truncf %142 : vector<8x32xf32> to vector<8x32xbf16>
    %cst_38 = arith.constant dense<0.000000e+00> : vector<8x128xf32>
    %149 = tpu.matmul %148, %11, %cst_38 {dimension_numbers = #tpu.dot_dimension_numbers<[1], [0], [0], [1], [0, 0, 1, 1], [], []>} : vector<8x32xbf16>, vector<32x128xbf16>, vector<8x128xf32> -> vector<8x128xf32>
    %150 = arith.addf %147, %149 : vector<8x128xf32>
    %151 = vector.extract_strided_slice %150 {offsets = [0, 0], sizes = [8, 32], strides = [1, 1]} : vector<8x128xf32> to vector<8x32xf32>
    %152 = arith.negf %151 : vector<8x32xf32>
    %153 = math.exp %152 : vector<8x32xf32>
    %cst_39 = arith.constant 1.000000e+00 : f32
    %154 = vector.broadcast %cst_39 : f32 to vector<8x32xf32>
    %155 = arith.addf %154, %153 : vector<8x32xf32>
    %156 = arith.divf %154, %155 : vector<8x32xf32>
    %157 = vector.extract_strided_slice %150 {offsets = [0, 32], sizes = [8, 32], strides = [1, 1]} : vector<8x128xf32> to vector<8x32xf32>
    %158 = arith.negf %157 : vector<8x32xf32>
    %159 = math.exp %158 : vector<8x32xf32>
    %cst_40 = arith.constant 1.000000e+00 : f32
    %160 = vector.broadcast %cst_40 : f32 to vector<8x32xf32>
    %161 = arith.addf %160, %159 : vector<8x32xf32>
    %162 = arith.divf %160, %161 : vector<8x32xf32>
    %163 = vector.extract_strided_slice %150 {offsets = [0, 64], sizes = [8, 32], strides = [1, 1]} : vector<8x128xf32> to vector<8x32xf32>
    %164 = math.tanh %163 : vector<8x32xf32>
    %165 = vector.extract_strided_slice %150 {offsets = [0, 96], sizes = [8, 32], strides = [1, 1]} : vector<8x128xf32> to vector<8x32xf32>
    %166 = arith.negf %165 : vector<8x32xf32>
    %167 = math.exp %166 : vector<8x32xf32>
    %cst_41 = arith.constant 1.000000e+00 : f32
    %168 = vector.broadcast %cst_41 : f32 to vector<8x32xf32>
    %169 = arith.addf %168, %167 : vector<8x32xf32>
    %170 = arith.divf %168, %169 : vector<8x32xf32>
    %171 = arith.mulf %162, %140 : vector<8x32xf32>
    %172 = arith.mulf %156, %164 : vector<8x32xf32>
    %173 = arith.addf %171, %172 : vector<8x32xf32>
    %174 = math.tanh %173 : vector<8x32xf32>
    %175 = arith.mulf %170, %174 : vector<8x32xf32>
    %c4 = arith.constant 4 : index
    %c0_42 = arith.constant 0 : index
    %c0_43 = arith.constant 0 : index
    %176 = vector.load %arg5[%c4, %c0_42, %c0_43] : memref<8x8x32xf32, #tpu.memory_space<vmem>>, vector<1x8x32xf32>
    %177 = vector.shape_cast %176 : vector<1x8x32xf32> to vector<8x32xf32>
    %178 = vector.shape_cast %175 : vector<8x32xf32> to vector<1x8x32xf32>
    tpu.vector_store %arg5[%c4, %c0_42, %c0_43], %178 {strides = array<i32>} : memref<8x8x32xf32, #tpu.memory_space<vmem>>, vector<1x8x32xf32>,
    %179 = vector.extract_strided_slice %10 {offsets = [5, 0, 0], sizes = [1, 8, 128], strides = [1, 1, 1]} : vector<8x8x128xf32> to vector<1x8x128xf32>
    %180 = vector.shape_cast %179 : vector<1x8x128xf32> to vector<8x128xf32>
    %181 = arith.truncf %175 : vector<8x32xf32> to vector<8x32xbf16>
    %cst_44 = arith.constant dense<0.000000e+00> : vector<8x128xf32>
    %182 = tpu.matmul %181, %11, %cst_44 {dimension_numbers = #tpu.dot_dimension_numbers<[1], [0], [0], [1], [0, 0, 1, 1], [], []>} : vector<8x32xbf16>, vector<32x128xbf16>, vector<8x128xf32> -> vector<8x128xf32>
    %183 = arith.addf %180, %182 : vector<8x128xf32>
    %184 = vector.extract_strided_slice %183 {offsets = [0, 0], sizes = [8, 32], strides = [1, 1]} : vector<8x128xf32> to vector<8x32xf32>
    %185 = arith.negf %184 : vector<8x32xf32>
    %186 = math.exp %185 : vector<8x32xf32>
    %cst_45 = arith.constant 1.000000e+00 : f32
    %187 = vector.broadcast %cst_45 : f32 to vector<8x32xf32>
    %188 = arith.addf %187, %186 : vector<8x32xf32>
    %189 = arith.divf %187, %188 : vector<8x32xf32>
    %190 = vector.extract_strided_slice %183 {offsets = [0, 32], sizes = [8, 32], strides = [1, 1]} : vector<8x128xf32> to vector<8x32xf32>
    %191 = arith.negf %190 : vector<8x32xf32>
    %192 = math.exp %191 : vector<8x32xf32>
    %cst_46 = arith.constant 1.000000e+00 : f32
    %193 = vector.broadcast %cst_46 : f32 to vector<8x32xf32>
    %194 = arith.addf %193, %192 : vector<8x32xf32>
    %195 = arith.divf %193, %194 : vector<8x32xf32>
    %196 = vector.extract_strided_slice %183 {offsets = [0, 64], sizes = [8, 32], strides = [1, 1]} : vector<8x128xf32> to vector<8x32xf32>
    %197 = math.tanh %196 : vector<8x32xf32>
    %198 = vector.extract_strided_slice %183 {offsets = [0, 96], sizes = [8, 32], strides = [1, 1]} : vector<8x128xf32> to vector<8x32xf32>
    %199 = arith.negf %198 : vector<8x32xf32>
    %200 = math.exp %199 : vector<8x32xf32>
    %cst_47 = arith.constant 1.000000e+00 : f32
    %201 = vector.broadcast %cst_47 : f32 to vector<8x32xf32>
    %202 = arith.addf %201, %200 : vector<8x32xf32>
    %203 = arith.divf %201, %202 : vector<8x32xf32>
    %204 = arith.mulf %195, %173 : vector<8x32xf32>
    %205 = arith.mulf %189, %197 : vector<8x32xf32>
    %206 = arith.addf %204, %205 : vector<8x32xf32>
    %207 = math.tanh %206 : vector<8x32xf32>
    %208 = arith.mulf %203, %207 : vector<8x32xf32>
    %c5 = arith.constant 5 : index
    %c0_48 = arith.constant 0 : index
    %c0_49 = arith.constant 0 : index
    %209 = vector.load %arg5[%c5, %c0_48, %c0_49] : memref<8x8x32xf32, #tpu.memory_space<vmem>>, vector<1x8x32xf32>
    %210 = vector.shape_cast %209 : vector<1x8x32xf32> to vector<8x32xf32>
    %211 = vector.shape_cast %208 : vector<8x32xf32> to vector<1x8x32xf32>
    tpu.vector_store %arg5[%c5, %c0_48, %c0_49], %211 {strides = array<i32>} : memref<8x8x32xf32, #tpu.memory_space<vmem>>, vector<1x8x32xf32>,
    %212 = vector.extract_strided_slice %10 {offsets = [6, 0, 0], sizes = [1, 8, 128], strides = [1, 1, 1]} : vector<8x8x128xf32> to vector<1x8x128xf32>
    %213 = vector.shape_cast %212 : vector<1x8x128xf32> to vector<8x128xf32>
    %214 = arith.truncf %208 : vector<8x32xf32> to vector<8x32xbf16>
    %cst_50 = arith.constant dense<0.000000e+00> : vector<8x128xf32>
    %215 = tpu.matmul %214, %11, %cst_50 {dimension_numbers = #tpu.dot_dimension_numbers<[1], [0], [0], [1], [0, 0, 1, 1], [], []>} : vector<8x32xbf16>, vector<32x128xbf16>, vector<8x128xf32> -> vector<8x128xf32>
    %216 = arith.addf %213, %215 : vector<8x128xf32>
    %217 = vector.extract_strided_slice %216 {offsets = [0, 0], sizes = [8, 32], strides = [1, 1]} : vector<8x128xf32> to vector<8x32xf32>
    %218 = arith.negf %217 : vector<8x32xf32>
    %219 = math.exp %218 : vector<8x32xf32>
    %cst_51 = arith.constant 1.000000e+00 : f32
    %220 = vector.broadcast %cst_51 : f32 to vector<8x32xf32>
    %221 = arith.addf %220, %219 : vector<8x32xf32>
    %222 = arith.divf %220, %221 : vector<8x32xf32>
    %223 = vector.extract_strided_slice %216 {offsets = [0, 32], sizes = [8, 32], strides = [1, 1]} : vector<8x128xf32> to vector<8x32xf32>
    %224 = arith.negf %223 : vector<8x32xf32>
    %225 = math.exp %224 : vector<8x32xf32>
    %cst_52 = arith.constant 1.000000e+00 : f32
    %226 = vector.broadcast %cst_52 : f32 to vector<8x32xf32>
    %227 = arith.addf %226, %225 : vector<8x32xf32>
    %228 = arith.divf %226, %227 : vector<8x32xf32>
    %229 = vector.extract_strided_slice %216 {offsets = [0, 64], sizes = [8, 32], strides = [1, 1]} : vector<8x128xf32> to vector<8x32xf32>
    %230 = math.tanh %229 : vector<8x32xf32>
    %231 = vector.extract_strided_slice %216 {offsets = [0, 96], sizes = [8, 32], strides = [1, 1]} : vector<8x128xf32> to vector<8x32xf32>
    %232 = arith.negf %231 : vector<8x32xf32>
    %233 = math.exp %232 : vector<8x32xf32>
    %cst_53 = arith.constant 1.000000e+00 : f32
    %234 = vector.broadcast %cst_53 : f32 to vector<8x32xf32>
    %235 = arith.addf %234, %233 : vector<8x32xf32>
    %236 = arith.divf %234, %235 : vector<8x32xf32>
    %237 = arith.mulf %228, %206 : vector<8x32xf32>
    %238 = arith.mulf %222, %230 : vector<8x32xf32>
    %239 = arith.addf %237, %238 : vector<8x32xf32>
    %240 = math.tanh %239 : vector<8x32xf32>
    %241 = arith.mulf %236, %240 : vector<8x32xf32>
    %c6 = arith.constant 6 : index
    %c0_54 = arith.constant 0 : index
    %c0_55 = arith.constant 0 : index
    %242 = vector.load %arg5[%c6, %c0_54, %c0_55] : memref<8x8x32xf32, #tpu.memory_space<vmem>>, vector<1x8x32xf32>
    %243 = vector.shape_cast %242 : vector<1x8x32xf32> to vector<8x32xf32>
    %244 = vector.shape_cast %241 : vector<8x32xf32> to vector<1x8x32xf32>
    tpu.vector_store %arg5[%c6, %c0_54, %c0_55], %244 {strides = array<i32>} : memref<8x8x32xf32, #tpu.memory_space<vmem>>, vector<1x8x32xf32>,
    %245 = vector.extract_strided_slice %10 {offsets = [7, 0, 0], sizes = [1, 8, 128], strides = [1, 1, 1]} : vector<8x8x128xf32> to vector<1x8x128xf32>
    %246 = vector.shape_cast %245 : vector<1x8x128xf32> to vector<8x128xf32>
    %247 = arith.truncf %241 : vector<8x32xf32> to vector<8x32xbf16>
    %cst_56 = arith.constant dense<0.000000e+00> : vector<8x128xf32>
    %248 = tpu.matmul %247, %11, %cst_56 {dimension_numbers = #tpu.dot_dimension_numbers<[1], [0], [0], [1], [0, 0, 1, 1], [], []>} : vector<8x32xbf16>, vector<32x128xbf16>, vector<8x128xf32> -> vector<8x128xf32>
    %249 = arith.addf %246, %248 : vector<8x128xf32>
    %250 = vector.extract_strided_slice %249 {offsets = [0, 0], sizes = [8, 32], strides = [1, 1]} : vector<8x128xf32> to vector<8x32xf32>
    %251 = arith.negf %250 : vector<8x32xf32>
    %252 = math.exp %251 : vector<8x32xf32>
    %cst_57 = arith.constant 1.000000e+00 : f32
    %253 = vector.broadcast %cst_57 : f32 to vector<8x32xf32>
    %254 = arith.addf %253, %252 : vector<8x32xf32>
    %255 = arith.divf %253, %254 : vector<8x32xf32>
    %256 = vector.extract_strided_slice %249 {offsets = [0, 32], sizes = [8, 32], strides = [1, 1]} : vector<8x128xf32> to vector<8x32xf32>
    %257 = arith.negf %256 : vector<8x32xf32>
    %258 = math.exp %257 : vector<8x32xf32>
    %cst_58 = arith.constant 1.000000e+00 : f32
    %259 = vector.broadcast %cst_58 : f32 to vector<8x32xf32>
    %260 = arith.addf %259, %258 : vector<8x32xf32>
    %261 = arith.divf %259, %260 : vector<8x32xf32>
    %262 = vector.extract_strided_slice %249 {offsets = [0, 64], sizes = [8, 32], strides = [1, 1]} : vector<8x128xf32> to vector<8x32xf32>
    %263 = math.tanh %262 : vector<8x32xf32>
    %264 = vector.extract_strided_slice %249 {offsets = [0, 96], sizes = [8, 32], strides = [1, 1]} : vector<8x128xf32> to vector<8x32xf32>
    %265 = arith.negf %264 : vector<8x32xf32>
    %266 = math.exp %265 : vector<8x32xf32>
    %cst_59 = arith.constant 1.000000e+00 : f32
    %267 = vector.broadcast %cst_59 : f32 to vector<8x32xf32>
    %268 = arith.addf %267, %266 : vector<8x32xf32>
    %269 = arith.divf %267, %268 : vector<8x32xf32>
    %270 = arith.mulf %261, %239 : vector<8x32xf32>
    %271 = arith.mulf %255, %263 : vector<8x32xf32>
    %272 = arith.addf %270, %271 : vector<8x32xf32>
    %273 = math.tanh %272 : vector<8x32xf32>
    %274 = arith.mulf %269, %273 : vector<8x32xf32>
    %c7 = arith.constant 7 : index
    %c0_60 = arith.constant 0 : index
    %c0_61 = arith.constant 0 : index
    %275 = vector.load %arg5[%c7, %c0_60, %c0_61] : memref<8x8x32xf32, #tpu.memory_space<vmem>>, vector<1x8x32xf32>
    %276 = vector.shape_cast %275 : vector<1x8x32xf32> to vector<8x32xf32>
    %277 = vector.shape_cast %274 : vector<8x32xf32> to vector<1x8x32xf32>
    tpu.vector_store %arg5[%c7, %c0_60, %c0_61], %277 {strides = array<i32>} : memref<8x8x32xf32, #tpu.memory_space<vmem>>, vector<1x8x32xf32>,
    %c0_62 = arith.constant 0 : index
    %c0_63 = arith.constant 0 : index
    %278 = vector.load %arg7[%c0_62, %c0_63] : memref<8x32xf32, #tpu.memory_space<vmem>>, vector<8x32xf32>
    tpu.vector_store %arg7[%c0_62, %c0_63], %274 {strides = array<i32>} : memref<8x32xf32, #tpu.memory_space<vmem>>, vector<8x32xf32>,
    %c0_64 = arith.constant 0 : index
    %c0_65 = arith.constant 0 : index
    %279 = vector.load %arg8[%c0_64, %c0_65] : memref<8x32xf32, #tpu.memory_space<vmem>>, vector<8x32xf32>
    tpu.vector_store %arg8[%c0_64, %c0_65], %272 {strides = array<i32>} : memref<8x32xf32, #tpu.memory_space<vmem>>, vector<8x32xf32>,
    %c0_66 = arith.constant 0 : index
    %c0_67 = arith.constant 0 : index
    %280 = vector.load %arg6[%c0_66, %c0_67] : memref<8x32xf32, #tpu.memory_space<vmem>>, vector<8x32xf32>
    tpu.vector_store %arg6[%c0_66, %c0_67], %272 {strides = array<i32>} : memref<8x32xf32, #tpu.memory_space<vmem>>, vector<8x32xf32>,
    return
  }
  func.func @transform_0(%arg0: i32) -> (i32, i32, i32) {
    %c0_i32 = arith.constant 0 : i32
    %c0_i32_0 = arith.constant 0 : i32
    %c0_i32_1 = arith.constant 0 : i32
    return %arg0, %c0_i32, %c0_i32_0 : i32, i32, i32
  }
  func.func @transform_1(%arg0: i32) -> (i32, i32) {
    %c0_i32 = arith.constant 0 : i32
    %c0_i32_0 = arith.constant 0 : i32
    %c0_i32_1 = arith.constant 0 : i32
    return %c0_i32, %c0_i32_0 : i32, i32
  }
  func.func @transform_2(%arg0: i32) -> (i32, i32) {
    %c0_i32 = arith.constant 0 : i32
    %c0_i32_0 = arith.constant 0 : i32
    %c0_i32_1 = arith.constant 0 : i32
    return %c0_i32, %c0_i32_0 : i32, i32
  }
  func.func @transform_3(%arg0: i32) -> (i32, i32) {
    %c0_i32 = arith.constant 0 : i32
    %c0_i32_0 = arith.constant 0 : i32
    %c0_i32_1 = arith.constant 0 : i32
    return %c0_i32, %c0_i32_0 : i32, i32
  }
  func.func @transform_4(%arg0: i32) -> (i32, i32, i32) {
    %c0_i32 = arith.constant 0 : i32
    %c0_i32_0 = arith.constant 0 : i32
    %c0_i32_1 = arith.constant 0 : i32
    return %arg0, %c0_i32, %c0_i32_0 : i32, i32, i32
  }
  func.func @transform_5(%arg0: i32) -> (i32, i32) {
    %c0_i32 = arith.constant 0 : i32
    %c0_i32_0 = arith.constant 0 : i32
    %c0_i32_1 = arith.constant 0 : i32
    return %c0_i32, %c0_i32_0 : i32, i32
  }
}

</mosaic_0001>

<llo_original>
// kernel: lstm_forward.1
$region0: #{lstm_forward.1}
  #allocation0 [shape = 'u32[]', space=smem, size = 0x4, offset = 0x4, fixed_abs, tag = 'smem constant byte address 0x4 - core index']
  #allocation1 [shape = 'u32[144,128]{1,0:T(1,128)}', space=vmem, size = 0x12000, scoped, tag = 'internal scratch']
  #allocation2 [shape = 'f32[8,32]{1,0:T(8,128)}', space=vmem, size = 0x1000, scoped, tag = 'scratch operand']
  #allocation3 [shape = 'f32[8,32]{1,0:T(8,128)}', space=vmem, size = 0x1000, scoped, tag = 'scratch operand']
  %s0 = inlined_call_operand.vmem [shape: bf16[8,8,32], index: 0, kind: input, shape index: {}]
  %s1 = inlined_call_operand.vmem [shape: bf16[32,128], index: 1, kind: input, shape index: {}]
  %s2 = inlined_call_operand.vmem [shape: bf16[32,128], index: 2, kind: input, shape index: {}]
  %s3 = inlined_call_operand.vmem [shape: f32[1,128], index: 3, kind: input, shape index: {}]
  %s4 = inlined_call_operand.vmem [shape: f32[8,8,32], index: 4, kind: output, shape index: {0}]
  %s5 = inlined_call_operand.vmem [shape: f32[8,32], index: 5, kind: output, shape index: {1}]
  %6 = xla_tuple %s4, %s5
  %s7 = sld [smem:[#allocation0]]
  $region38: #{lstm_forward.1} parent=0
    _
  %s9 = ssub.s32 1, %s7
  %s10 = scalar_select 0, %s9, %s7
  // Predicated region
  $region2: #{lstm_forward.1} parent=0 // pred_check
    _
  $region3: #{lstm_forward.1} parent=0 // pred_check_branch
    %12 = sbr.rel (0) target = $region5
  $region4: #{lstm_forward.1} parent=0 // pred_region
    _
  $region5: #{lstm_forward.1} parent=0 // pred_fallthru
    _
  // Predicated region
  $region6: #{lstm_forward.1} parent=0 // pred_check
    _
  $region7: #{lstm_forward.1} parent=0 // pred_check_branch
    %14 = sbr.rel (0) target = $region9
  $region8: #{lstm_forward.1} parent=0 // pred_region
    _
  $region9: #{lstm_forward.1} parent=0 // pred_fallthru
    _
  // Predicated region
  $region10: #{lstm_forward.1} parent=0 // pred_check
    _
  $region11: #{lstm_forward.1} parent=0 // pred_check_branch
    %16 = sbr.rel (0) target = $region13
  $region12: #{lstm_forward.1} parent=0 // pred_region
    _
  $region13: #{lstm_forward.1} parent=0 // pred_fallthru
    _
  // Predicated region
  $region14: #{lstm_forward.1} parent=0 // pred_check
    _
  $region15: #{lstm_forward.1} parent=0 // pred_check_branch
    %18 = sbr.rel (0) target = $region17
  $region16: #{lstm_forward.1} parent=0 // pred_region
    _
  $region17: #{lstm_forward.1} parent=0 // pred_fallthru
    _
  %p20 = scmp.eq.s32.totalorder 0, 0
  // Predicated region
  $region18: #{lstm_forward.1} parent=0 // pred_check
    %p21 = pneg %p20
  $region19: #{lstm_forward.1} parent=0 // pred_check_branch
    %23 = sbr.rel (%p21) target = $region21
  $region20: #{lstm_forward.1} parent=0 // pred_region
    %vm24 = vcmask 261120
    %25 = vst.msk [vmem:[#allocation2] sm:$0xff] %vm24, 0.0
    %26 = vst.msk [vmem:[#allocation3] sm:$0xff] %vm24, 0.0
  $region21: #{lstm_forward.1} parent=0 // pred_fallthru
    _
  %v27 = vld [vmem:[%s0] sm:$0xf]
  %v28 = vld [vmem:[%s0 + $0x4] sm:$0xf]
  %v29 = vld [vmem:[%s0 + $0x8] sm:$0xf]
  %v30 = vld [vmem:[%s0 + $0xc] sm:$0xf]
  %v31 = vld [vmem:[%s0 + $0x10] sm:$0xf]
  %v32 = vld [vmem:[%s0 + $0x14] sm:$0xf]
  %v33 = vld [vmem:[%s0 + $0x18] sm:$0xf]
  %v34 = vld [vmem:[%s0 + $0x1c] sm:$0xf]
  %v35 = vld [vmem:[%s1] sm:$0xf]
  %v36 = vld [vmem:[%s1 + $0x4] sm:$0xf]
  %v37 = vld [vmem:[%s1 + $0x8] sm:$0xf]
  %v38 = vld [vmem:[%s1 + $0xc] sm:$0xf]
  %v39 = vld [vmem:[%s3] sm:$0x1]
  %v41 = vlaneseq
  %v42 = vshrl.u32 %v41, 7
  %v43 = vsub.s32 0, %v42
  %v44 = vrot.slane %v39, %v43
  %v54 = vunpack.c.l.b16 %v27
  %v55 = vunpack.c.l.b16 %v28
  %v56 = vunpack.c.l.b16 %v29
  %v57 = vunpack.c.l.b16 %v30
  %v58 = vunpack.c.l.b16 %v31
  %v59 = vunpack.c.l.b16 %v32
  %v60 = vunpack.c.l.b16 %v33
  %v61 = vunpack.c.l.b16 %v34
  %v62 = vpack.c.b16 %v55, %v54
  %v63 = vpack.c.b16 %v57, %v56
  %v64 = vpack.c.b16 %v59, %v58
  %v65 = vpack.c.b16 %v61, %v60
  %v70 = vunpack.c.l.b16 %v35
  %v71 = vunpack.c.l.b16 %v36
  %v72 = vunpack.c.l.b16 %v37
  %v73 = vunpack.c.l.b16 %v38
  %v74 = vpack.c.b16 %v71, %v70
  %v75 = vpack.c.b16 %v73, %v72
  %vm78 = vcmask 261120
  %v80 = vsel %vm78, %v62, 0
  %v83 = vsel %vm78, %v63, 0
  %v86 = vsel %vm78, %v64, 0
  %v89 = vsel %vm78, %v65, 0
  %91 = vmatprep.subr.bf16.mxu0 0
  %92 = vmatpush1.bf16.msra.mxu0 %v74
  %93 = vmatprep.subr.bf16.mxu0 0
  %94 = vmatpush1.bf16.msra.mxu0 %v75
  %95 = vmatprep.subr.bf16.mxu0 0
  %96 = vmatpush1.bf16.msra.mxu0 0
  %97 = vmatprep.subr.bf16.mxu0 0
  %98 = vmatpush1.bf16.msra.mxu0 0
  %99 = vmatprep.subr.bf16.mxu0 0
  %100 = vmatpush1.bf16.msra.mxu0 0
  %101 = vmatprep.subr.bf16.mxu0 0
  %102 = vmatpush1.bf16.msra.mxu0 0
  %103 = vmatprep.subr.bf16.mxu0 0
  %104 = vmatpush1.bf16.msra.mxu0 0
  %105 = vmatprep.subr.bf16.mxu0 0
  %106 = vmatpush1.bf16.msra.mxu0 0
  %107 = vmatprep.subr.bf16.mxu0 0
  %108 = vmatpush1.bf16.msra.mxu0 0
  %109 = vmatprep.subr.bf16.mxu0 0
  %110 = vmatpush1.bf16.msra.mxu0 0
  %111 = vmatprep.subr.bf16.mxu0 0
  %112 = vmatpush1.bf16.msra.mxu0 0
  %113 = vmatprep.subr.bf16.mxu0 0
  %114 = vmatpush1.bf16.msra.mxu0 0
  %115 = vmatprep.subr.bf16.mxu0 0
  %116 = vmatpush1.bf16.msra.mxu0 0
  %117 = vmatprep.subr.bf16.mxu0 0
  %118 = vmatpush1.bf16.msra.mxu0 0
  %119 = vmatprep.subr.bf16.mxu0 0
  %120 = vmatpush1.bf16.msra.mxu0 0
  %121 = vmatprep.subr.bf16.mxu0 0
  %122 = vmatpush1.bf16.msra.mxu0 0
  %123 = vmatprep.mubr.bf16.mxu0 0
  %124 = vmatmul.mubr.bf16.gmra.mrb[0].mxu0 %v80
  %v125 = vpop.f32.mrb[0].mxu0
  %v126 = vadd.f32 %v44, %v125
  %v127 = vpop.f32.mrb[0].mxu0
  %v128 = vpop.f32.mrb[0].mxu0
  %v129 = vadd.f32 %v44, %v128
  %v130 = vpop.f32.mrb[0].mxu0
  %131 = vmatprep.mubr.bf16.mxu0 0
  %132 = vmatmul.mubr.bf16.gmra.mrb[0].mxu0 %v83
  %v133 = vpop.f32.mrb[0].mxu0
  %v134 = vadd.f32 %v44, %v133
  %v135 = vpop.f32.mrb[0].mxu0
  %v136 = vpop.f32.mrb[0].mxu0
  %v137 = vadd.f32 %v44, %v136
  %v138 = vpop.f32.mrb[0].mxu0
  %139 = vmatprep.mubr.bf16.mxu0 0
  %140 = vmatmul.mubr.bf16.gmra.mrb[0].mxu0 %v86
  %v141 = vpop.f32.mrb[0].mxu0
  %v142 = vadd.f32 %v44, %v141
  %v143 = vpop.f32.mrb[0].mxu0
  %v144 = vpop.f32.mrb[0].mxu0
  %v145 = vadd.f32 %v44, %v144
  %v146 = vpop.f32.mrb[0].mxu0
  %147 = vmatprep.mubr.bf16.mxu0 0
  %148 = vmatmul.mubr.bf16.gmra.mrb[0].mxu0 %v89
  %v149 = vpop.f32.mrb[0].mxu0
  %v150 = vadd.f32 %v44, %v149
  %v151 = vpop.f32.mrb[0].mxu0
  %v152 = vpop.f32.mrb[0].mxu0
  %v153 = vadd.f32 %v44, %v152
  %v154 = vpop.f32.mrb[0].mxu0
  %155 = vdwg.mxu0
  %v156 = vld [vmem:[%s2] sm:$0xf]
  %v157 = vld [vmem:[%s2 + $0x4] sm:$0xf]
  %v158 = vld [vmem:[%s2 + $0x8] sm:$0xf]
  %v159 = vld [vmem:[%s2 + $0xc] sm:$0xf]
  %v160 = vld [vmem:[#allocation2] sm:$0xff]
  %v161 = vld [vmem:[#allocation3] sm:$0xff]
  %v162 = vpack.c.bf16 %v160, %v160
  %v167 = vunpack.c.l.b16 %v156
  %v168 = vunpack.c.l.b16 %v157
  %v169 = vunpack.c.l.b16 %v158
  %v170 = vunpack.c.l.b16 %v159
  %v171 = vpack.c.b16 %v168, %v167
  %v172 = vpack.c.b16 %v170, %v169
  %v176 = vsel %vm78, %v162, 0
  %178 = vmatprep.subr.bf16.mxu0 0
  %179 = vmatpush1.bf16.msra.mxu0 %v171
  %180 = vmatprep.subr.bf16.mxu0 0
  %181 = vmatpush1.bf16.msra.mxu0 %v172
  %182 = vmatprep.subr.bf16.mxu0 0
  %183 = vmatpush1.bf16.msra.mxu0 0
  %184 = vmatprep.subr.bf16.mxu0 0
  %185 = vmatpush1.bf16.msra.mxu0 0
  %186 = vmatprep.subr.bf16.mxu0 0
  %187 = vmatpush1.bf16.msra.mxu0 0
  %188 = vmatprep.subr.bf16.mxu0 0
  %189 = vmatpush1.bf16.msra.mxu0 0
  %190 = vmatprep.subr.bf16.mxu0 0
  %191 = vmatpush1.bf16.msra.mxu0 0
  %192 = vmatprep.subr.bf16.mxu0 0
  %193 = vmatpush1.bf16.msra.mxu0 0
  %194 = vmatprep.subr.bf16.mxu0 0
  %195 = vmatpush1.bf16.msra.mxu0 0
  %196 = vmatprep.subr.bf16.mxu0 0
  %197 = vmatpush1.bf16.msra.mxu0 0
  %198 = vmatprep.subr.bf16.mxu0 0
  %199 = vmatpush1.bf16.msra.mxu0 0
  %200 = vmatprep.subr.bf16.mxu0 0
  %201 = vmatpush1.bf16.msra.mxu0 0
  %202 = vmatprep.subr.bf16.mxu0 0
  %203 = vmatpush1.bf16.msra.mxu0 0
  %204 = vmatprep.subr.bf16.mxu0 0
  %205 = vmatpush1.bf16.msra.mxu0 0
  %206 = vmatprep.subr.bf16.mxu0 0
  %207 = vmatpush1.bf16.msra.mxu0 0
  %208 = vmatprep.subr.bf16.mxu0 0
  %209 = vmatpush1.bf16.msra.mxu0 0
  %210 = vmatprep.mubr.bf16.mxu0 0
  %211 = vmatmul.mubr.bf16.gmra.mrb[0].mxu0 %v176
  %v212 = vpop.f32.mrb[0].mxu0
  %v213 = vadd.f32 0.0, %v212
  %v214 = vpop.f32.mrb[0].mxu0
  %v215 = vpop.f32.mrb[0].mxu0
  %v216 = vpop.f32.mrb[0].mxu0
  %217 = vdwg.mxu0
  %v218 = vadd.f32 %v126, %v213
  %v219 = vxor.u32 %v218, 2147483648
  %v220 = vmul.f32 %v219, 1.442695
  %v221 = vpow.pop %v220
  %v222 = vadd.f32 %v221, 1.0
  %v223 = vrcp.pop %v222
  %v224 = vmul.f32 1.0, %v223
  %v225 = vtanh.pop %v218
  %227 = vrot.lane.b32.xlu0 %v161, 32
  %v228 = vpop.permute.xlu0 %227
  %v230 = vmul.f32 %v224, %v228
  %232 = vrot.lane.b32.xlu0 %v225, 64
  %v233 = vpop.permute.xlu0 %232
  %v235 = vmul.f32 %v224, %v233
  %237 = vrot.lane.b32.xlu0 %v235, 32
  %v238 = vpop.permute.xlu0 %237
  %v240 = vadd.f32 %v230, %v238
  %v241 = vtanh.pop %v240
  %243 = vrot.lane.b32.xlu0 %v241, 64
  %v244 = vpop.permute.xlu0 %243
  %v246 = vmul.f32 %v224, %v244
  %248 = vrot.lane.b32.xlu0 %v246, 32
  %v249 = vpop.permute.xlu0 %248
  %251 = vst.msk [vmem:[%s4] sm:$0xff] %vm78, %v249
  %v252 = vpack.c.bf16 %v246, %v246
  %254 = vrot.lane.b32.xlu0 %v252, 32
  %v255 = vpop.permute.xlu0 %254
  %v257 = vsel %vm78, %v255, 0
  %259 = vmatprep.subr.bf16.mxu0 0
  %260 = vmatpush1.bf16.msra.mxu0 %v171
  %261 = vmatprep.subr.bf16.mxu0 0
  %262 = vmatpush1.bf16.msra.mxu0 %v172
  %263 = vmatprep.subr.bf16.mxu0 0
  %264 = vmatpush1.bf16.msra.mxu0 0
  %265 = vmatprep.subr.bf16.mxu0 0
  %266 = vmatpush1.bf16.msra.mxu0 0
  %267 = vmatprep.subr.bf16.mxu0 0
  %268 = vmatpush1.bf16.msra.mxu0 0
  %269 = vmatprep.subr.bf16.mxu0 0
  %270 = vmatpush1.bf16.msra.mxu0 0
  %271 = vmatprep.subr.bf16.mxu0 0
  %272 = vmatpush1.bf16.msra.mxu0 0
  %273 = vmatprep.subr.bf16.mxu0 0
  %274 = vmatpush1.bf16.msra.mxu0 0
  %275 = vmatprep.subr.bf16.mxu0 0
  %276 = vmatpush1.bf16.msra.mxu0 0
  %277 = vmatprep.subr.bf16.mxu0 0
  %278 = vmatpush1.bf16.msra.mxu0 0
  %279 = vmatprep.subr.bf16.mxu0 0
  %280 = vmatpush1.bf16.msra.mxu0 0
  %281 = vmatprep.subr.bf16.mxu0 0
  %282 = vmatpush1.bf16.msra.mxu0 0
  %283 = vmatprep.subr.bf16.mxu0 0
  %284 = vmatpush1.bf16.msra.mxu0 0
  %285 = vmatprep.subr.bf16.mxu0 0
  %286 = vmatpush1.bf16.msra.mxu0 0
  %287 = vmatprep.subr.bf16.mxu0 0
  %288 = vmatpush1.bf16.msra.mxu0 0
  %289 = vmatprep.subr.bf16.mxu0 0
  %290 = vmatpush1.bf16.msra.mxu0 0
  %291 = vmatprep.mubr.bf16.mxu0 0
  %292 = vmatmul.mubr.bf16.gmra.mrb[0].mxu0 %v257
  %v293 = vpop.f32.mrb[0].mxu0
  %v294 = vadd.f32 0.0, %v293
  %v295 = vpop.f32.mrb[0].mxu0
  %v296 = vpop.f32.mrb[0].mxu0
  %v297 = vpop.f32.mrb[0].mxu0
  %298 = vdwg.mxu0
  %v299 = vadd.f32 %v129, %v294
  %v300 = vxor.u32 %v299, 2147483648
  %v301 = vmul.f32 %v300, 1.442695
  %v302 = vpow.pop %v301
  %v303 = vadd.f32 %v302, 1.0
  %v304 = vrcp.pop %v303
  %v305 = vmul.f32 1.0, %v304
  %v306 = vtanh.pop %v299
  %v307 = vmul.f32 %v305, %v240
  %309 = vrot.lane.b32.xlu0 %v306, 64
  %v310 = vpop.permute.xlu0 %309
  %v312 = vmul.f32 %v305, %v310
  %314 = vrot.lane.b32.xlu0 %v312, 32
  %v315 = vpop.permute.xlu0 %314
  %v317 = vadd.f32 %v307, %v315
  %v318 = vtanh.pop %v317
  %320 = vrot.lane.b32.xlu0 %v318, 64
  %v321 = vpop.permute.xlu0 %320
  %v323 = vmul.f32 %v305, %v321
  %325 = vrot.lane.b32.xlu0 %v323, 32
  %v326 = vpop.permute.xlu0 %325
  %s328 = scalar_lea.vmem %s4, 8
  %329 = vst.msk [vmem:[%s328] sm:$0xff] %vm78, %v326
  %v330 = vpack.c.bf16 %v323, %v323
  %332 = vrot.lane.b32.xlu0 %v330, 32
  %v333 = vpop.permute.xlu0 %332
  %v335 = vsel %vm78, %v333, 0
  %337 = vmatprep.subr.bf16.mxu0 0
  %338 = vmatpush1.bf16.msra.mxu0 %v171
  %339 = vmatprep.subr.bf16.mxu0 0
  %340 = vmatpush1.bf16.msra.mxu0 %v172
  %341 = vmatprep.subr.bf16.mxu0 0
  %342 = vmatpush1.bf16.msra.mxu0 0
  %343 = vmatprep.subr.bf16.mxu0 0
  %344 = vmatpush1.bf16.msra.mxu0 0
  %345 = vmatprep.subr.bf16.mxu0 0
  %346 = vmatpush1.bf16.msra.mxu0 0
  %347 = vmatprep.subr.bf16.mxu0 0
  %348 = vmatpush1.bf16.msra.mxu0 0
  %349 = vmatprep.subr.bf16.mxu0 0
  %350 = vmatpush1.bf16.msra.mxu0 0
  %351 = vmatprep.subr.bf16.mxu0 0
  %352 = vmatpush1.bf16.msra.mxu0 0
  %353 = vmatprep.subr.bf16.mxu0 0
  %354 = vmatpush1.bf16.msra.mxu0 0
  %355 = vmatprep.subr.bf16.mxu0 0
  %356 = vmatpush1.bf16.msra.mxu0 0
  %357 = vmatprep.subr.bf16.mxu0 0
  %358 = vmatpush1.bf16.msra.mxu0 0
  %359 = vmatprep.subr.bf16.mxu0 0
  %360 = vmatpush1.bf16.msra.mxu0 0
  %361 = vmatprep.subr.bf16.mxu0 0
  %362 = vmatpush1.bf16.msra.mxu0 0
  %363 = vmatprep.subr.bf16.mxu0 0
  %364 = vmatpush1.bf16.msra.mxu0 0
  %365 = vmatprep.subr.bf16.mxu0 0
  %366 = vmatpush1.bf16.msra.mxu0 0
  %367 = vmatprep.subr.bf16.mxu0 0
  %368 = vmatpush1.bf16.msra.mxu0 0
  %369 = vmatprep.mubr.bf16.mxu0 0
  %370 = vmatmul.mubr.bf16.gmra.mrb[0].mxu0 %v335
  %v371 = vpop.f32.mrb[0].mxu0
  %v372 = vadd.f32 0.0, %v371
  %v373 = vpop.f32.mrb[0].mxu0
  %v374 = vpop.f32.mrb[0].mxu0
  %v375 = vpop.f32.mrb[0].mxu0
  %376 = vdwg.mxu0
  %v377 = vadd.f32 %v134, %v372
  %v378 = vxor.u32 %v377, 2147483648
  %v379 = vmul.f32 %v378, 1.442695
  %v380 = vpow.pop %v379
  %v381 = vadd.f32 %v380, 1.0
  %v382 = vrcp.pop %v381
  %v383 = vmul.f32 1.0, %v382
  %v384 = vtanh.pop %v377
  %v385 = vmul.f32 %v383, %v317
  %387 = vrot.lane.b32.xlu0 %v384, 64
  %v388 = vpop.permute.xlu0 %387
  %v390 = vmul.f32 %v383, %v388
  %392 = vrot.lane.b32.xlu0 %v390, 32
  %v393 = vpop.permute.xlu0 %392
  %v395 = vadd.f32 %v385, %v393
  %v396 = vtanh.pop %v395
  %398 = vrot.lane.b32.xlu0 %v396, 64
  %v399 = vpop.permute.xlu0 %398
  %v401 = vmul.f32 %v383, %v399
  %403 = vrot.lane.b32.xlu0 %v401, 32
  %v404 = vpop.permute.xlu0 %403
  %s406 = scalar_lea.vmem %s4, 16
  %407 = vst.msk [vmem:[%s406] sm:$0xff] %vm78, %v404
  %v408 = vpack.c.bf16 %v401, %v401
  %410 = vrot.lane.b32.xlu0 %v408, 32
  %v411 = vpop.permute.xlu0 %410
  %v413 = vsel %vm78, %v411, 0
  %415 = vmatprep.subr.bf16.mxu0 0
  %416 = vmatpush1.bf16.msra.mxu0 %v171
  %417 = vmatprep.subr.bf16.mxu0 0
  %418 = vmatpush1.bf16.msra.mxu0 %v172
  %419 = vmatprep.subr.bf16.mxu0 0
  %420 = vmatpush1.bf16.msra.mxu0 0
  %421 = vmatprep.subr.bf16.mxu0 0
  %422 = vmatpush1.bf16.msra.mxu0 0
  %423 = vmatprep.subr.bf16.mxu0 0
  %424 = vmatpush1.bf16.msra.mxu0 0
  %425 = vmatprep.subr.bf16.mxu0 0
  %426 = vmatpush1.bf16.msra.mxu0 0
  %427 = vmatprep.subr.bf16.mxu0 0
  %428 = vmatpush1.bf16.msra.mxu0 0
  %429 = vmatprep.subr.bf16.mxu0 0
  %430 = vmatpush1.bf16.msra.mxu0 0
  %431 = vmatprep.subr.bf16.mxu0 0
  %432 = vmatpush1.bf16.msra.mxu0 0
  %433 = vmatprep.subr.bf16.mxu0 0
  %434 = vmatpush1.bf16.msra.mxu0 0
  %435 = vmatprep.subr.bf16.mxu0 0
  %436 = vmatpush1.bf16.msra.mxu0 0
  %437 = vmatprep.subr.bf16.mxu0 0
  %438 = vmatpush1.bf16.msra.mxu0 0
  %439 = vmatprep.subr.bf16.mxu0 0
  %440 = vmatpush1.bf16.msra.mxu0 0
  %441 = vmatprep.subr.bf16.mxu0 0
  %442 = vmatpush1.bf16.msra.mxu0 0
  %443 = vmatprep.subr.bf16.mxu0 0
  %444 = vmatpush1.bf16.msra.mxu0 0
  %445 = vmatprep.subr.bf16.mxu0 0
  %446 = vmatpush1.bf16.msra.mxu0 0
  %447 = vmatprep.mubr.bf16.mxu0 0
  %448 = vmatmul.mubr.bf16.gmra.mrb[0].mxu0 %v413
  %v449 = vpop.f32.mrb[0].mxu0
  %v450 = vadd.f32 0.0, %v449
  %v451 = vpop.f32.mrb[0].mxu0
  %v452 = vpop.f32.mrb[0].mxu0
  %v453 = vpop.f32.mrb[0].mxu0
  %454 = vdwg.mxu0
  %v455 = vadd.f32 %v137, %v450
  %v456 = vxor.u32 %v455, 2147483648
  %v457 = vmul.f32 %v456, 1.442695
  %v458 = vpow.pop %v457
  %v459 = vadd.f32 %v458, 1.0
  %v460 = vrcp.pop %v459
  %v461 = vmul.f32 1.0, %v460
  %v462 = vtanh.pop %v455
  %v463 = vmul.f32 %v461, %v395
  %465 = vrot.lane.b32.xlu0 %v462, 64
  %v466 = vpop.permute.xlu0 %465
  %v468 = vmul.f32 %v461, %v466
  %470 = vrot.lane.b32.xlu0 %v468, 32
  %v471 = vpop.permute.xlu0 %470
  %v473 = vadd.f32 %v463, %v471
  %v474 = vtanh.pop %v473
  %476 = vrot.lane.b32.xlu0 %v474, 64
  %v477 = vpop.permute.xlu0 %476
  %v479 = vmul.f32 %v461, %v477
  %481 = vrot.lane.b32.xlu0 %v479, 32
  %v482 = vpop.permute.xlu0 %481
  %s484 = scalar_lea.vmem %s4, 24
  %485 = vst.msk [vmem:[%s484] sm:$0xff] %vm78, %v482
  %v486 = vpack.c.bf16 %v479, %v479
  %488 = vrot.lane.b32.xlu0 %v486, 32
  %v489 = vpop.permute.xlu0 %488
  %v491 = vsel %vm78, %v489, 0
  %493 = vmatprep.subr.bf16.mxu0 0
  %494 = vmatpush1.bf16.msra.mxu0 %v171
  %495 = vmatprep.subr.bf16.mxu0 0
  %496 = vmatpush1.bf16.msra.mxu0 %v172
  %497 = vmatprep.subr.bf16.mxu0 0
  %498 = vmatpush1.bf16.msra.mxu0 0
  %499 = vmatprep.subr.bf16.mxu0 0
  %500 = vmatpush1.bf16.msra.mxu0 0
  %501 = vmatprep.subr.bf16.mxu0 0
  %502 = vmatpush1.bf16.msra.mxu0 0
  %503 = vmatprep.subr.bf16.mxu0 0
  %504 = vmatpush1.bf16.msra.mxu0 0
  %505 = vmatprep.subr.bf16.mxu0 0
  %506 = vmatpush1.bf16.msra.mxu0 0
  %507 = vmatprep.subr.bf16.mxu0 0
  %508 = vmatpush1.bf16.msra.mxu0 0
  %509 = vmatprep.subr.bf16.mxu0 0
  %510 = vmatpush1.bf16.msra.mxu0 0
  %511 = vmatprep.subr.bf16.mxu0 0
  %512 = vmatpush1.bf16.msra.mxu0 0
  %513 = vmatprep.subr.bf16.mxu0 0
  %514 = vmatpush1.bf16.msra.mxu0 0
  %515 = vmatprep.subr.bf16.mxu0 0
  %516 = vmatpush1.bf16.msra.mxu0 0
  %517 = vmatprep.subr.bf16.mxu0 0
  %518 = vmatpush1.bf16.msra.mxu0 0
  %519 = vmatprep.subr.bf16.mxu0 0
  %520 = vmatpush1.bf16.msra.mxu0 0
  %521 = vmatprep.subr.bf16.mxu0 0
  %522 = vmatpush1.bf16.msra.mxu0 0
  %523 = vmatprep.subr.bf16.mxu0 0
  %524 = vmatpush1.bf16.msra.mxu0 0
  %525 = vmatprep.mubr.bf16.mxu0 0
  %526 = vmatmul.mubr.bf16.gmra.mrb[0].mxu0 %v491
  %v527 = vpop.f32.mrb[0].mxu0
  %v528 = vadd.f32 0.0, %v527
  %v529 = vpop.f32.mrb[0].mxu0
  %v530 = vpop.f32.mrb[0].mxu0
  %v531 = vpop.f32.mrb[0].mxu0
  %532 = vdwg.mxu0
  %v533 = vadd.f32 %v142, %v528
  %v534 = vxor.u32 %v533, 2147483648
  %v535 = vmul.f32 %v534, 1.442695
  %v536 = vpow.pop %v535
  %v537 = vadd.f32 %v536, 1.0
  %v538 = vrcp.pop %v537
  %v539 = vmul.f32 1.0, %v538
  %v540 = vtanh.pop %v533
  %v541 = vmul.f32 %v539, %v473
  %543 = vrot.lane.b32.xlu0 %v540, 64
  %v544 = vpop.permute.xlu0 %543
  %v546 = vmul.f32 %v539, %v544
  %548 = vrot.lane.b32.xlu0 %v546, 32
  %v549 = vpop.permute.xlu0 %548
  %v551 = vadd.f32 %v541, %v549
  %v552 = vtanh.pop %v551
  %554 = vrot.lane.b32.xlu0 %v552, 64
  %v555 = vpop.permute.xlu0 %554
  %v557 = vmul.f32 %v539, %v555
  %559 = vrot.lane.b32.xlu0 %v557, 32
  %v560 = vpop.permute.xlu0 %559
  %s562 = scalar_lea.vmem %s4, 32
  %563 = vst.msk [vmem:[%s562] sm:$0xff] %vm78, %v560
  %v564 = vpack.c.bf16 %v557, %v557
  %566 = vrot.lane.b32.xlu0 %v564, 32
  %v567 = vpop.permute.xlu0 %566
  %v569 = vsel %vm78, %v567, 0
  %571 = vmatprep.subr.bf16.mxu0 0
  %572 = vmatpush1.bf16.msra.mxu0 %v171
  %573 = vmatprep.subr.bf16.mxu0 0
  %574 = vmatpush1.bf16.msra.mxu0 %v172
  %575 = vmatprep.subr.bf16.mxu0 0
  %576 = vmatpush1.bf16.msra.mxu0 0
  %577 = vmatprep.subr.bf16.mxu0 0
  %578 = vmatpush1.bf16.msra.mxu0 0
  %579 = vmatprep.subr.bf16.mxu0 0
  %580 = vmatpush1.bf16.msra.mxu0 0
  %581 = vmatprep.subr.bf16.mxu0 0
  %582 = vmatpush1.bf16.msra.mxu0 0
  %583 = vmatprep.subr.bf16.mxu0 0
  %584 = vmatpush1.bf16.msra.mxu0 0
  %585 = vmatprep.subr.bf16.mxu0 0
  %586 = vmatpush1.bf16.msra.mxu0 0
  %587 = vmatprep.subr.bf16.mxu0 0
  %588 = vmatpush1.bf16.msra.mxu0 0
  %589 = vmatprep.subr.bf16.mxu0 0
  %590 = vmatpush1.bf16.msra.mxu0 0
  %591 = vmatprep.subr.bf16.mxu0 0
  %592 = vmatpush1.bf16.msra.mxu0 0
  %593 = vmatprep.subr.bf16.mxu0 0
  %594 = vmatpush1.bf16.msra.mxu0 0
  %595 = vmatprep.subr.bf16.mxu0 0
  %596 = vmatpush1.bf16.msra.mxu0 0
  %597 = vmatprep.subr.bf16.mxu0 0
  %598 = vmatpush1.bf16.msra.mxu0 0
  %599 = vmatprep.subr.bf16.mxu0 0
  %600 = vmatpush1.bf16.msra.mxu0 0
  %601 = vmatprep.subr.bf16.mxu0 0
  %602 = vmatpush1.bf16.msra.mxu0 0
  %603 = vmatprep.mubr.bf16.mxu0 0
  %604 = vmatmul.mubr.bf16.gmra.mrb[0].mxu0 %v569
  %v605 = vpop.f32.mrb[0].mxu0
  %v606 = vadd.f32 0.0, %v605
  %v607 = vpop.f32.mrb[0].mxu0
  %v608 = vpop.f32.mrb[0].mxu0
  %v609 = vpop.f32.mrb[0].mxu0
  %610 = vdwg.mxu0
  %v611 = vadd.f32 %v145, %v606
  %v612 = vxor.u32 %v611, 2147483648
  %v613 = vmul.f32 %v612, 1.442695
  %v614 = vpow.pop %v613
  %v615 = vadd.f32 %v614, 1.0
  %v616 = vrcp.pop %v615
  %v617 = vmul.f32 1.0, %v616
  %v618 = vtanh.pop %v611
  %v619 = vmul.f32 %v617, %v551
  %621 = vrot.lane.b32.xlu0 %v618, 64
  %v622 = vpop.permute.xlu0 %621
  %v624 = vmul.f32 %v617, %v622
  %626 = vrot.lane.b32.xlu0 %v624, 32
  %v627 = vpop.permute.xlu0 %626
  %v629 = vadd.f32 %v619, %v627
  %v630 = vtanh.pop %v629
  %632 = vrot.lane.b32.xlu0 %v630, 64
  %v633 = vpop.permute.xlu0 %632
  %v635 = vmul.f32 %v617, %v633
  %637 = vrot.lane.b32.xlu0 %v635, 32
  %v638 = vpop.permute.xlu0 %637
  %s640 = scalar_lea.vmem %s4, 40
  %641 = vst.msk [vmem:[%s640] sm:$0xff] %vm78, %v638
  %v642 = vpack.c.bf16 %v635, %v635
  %644 = vrot.lane.b32.xlu0 %v642, 32
  %v645 = vpop.permute.xlu0 %644
  %v647 = vsel %vm78, %v645, 0
  %649 = vmatprep.subr.bf16.mxu0 0
  %650 = vmatpush1.bf16.msra.mxu0 %v171
  %651 = vmatprep.subr.bf16.mxu0 0
  %652 = vmatpush1.bf16.msra.mxu0 %v172
  %653 = vmatprep.subr.bf16.mxu0 0
  %654 = vmatpush1.bf16.msra.mxu0 0
  %655 = vmatprep.subr.bf16.mxu0 0
  %656 = vmatpush1.bf16.msra.mxu0 0
  %657 = vmatprep.subr.bf16.mxu0 0
  %658 = vmatpush1.bf16.msra.mxu0 0
  %659 = vmatprep.subr.bf16.mxu0 0
  %660 = vmatpush1.bf16.msra.mxu0 0
  %661 = vmatprep.subr.bf16.mxu0 0
  %662 = vmatpush1.bf16.msra.mxu0 0
  %663 = vmatprep.subr.bf16.mxu0 0
  %664 = vmatpush1.bf16.msra.mxu0 0
  %665 = vmatprep.subr.bf16.mxu0 0
  %666 = vmatpush1.bf16.msra.mxu0 0
  %667 = vmatprep.subr.bf16.mxu0 0
  %668 = vmatpush1.bf16.msra.mxu0 0
  %669 = vmatprep.subr.bf16.mxu0 0
  %670 = vmatpush1.bf16.msra.mxu0 0
  %671 = vmatprep.subr.bf16.mxu0 0
  %672 = vmatpush1.bf16.msra.mxu0 0
  %673 = vmatprep.subr.bf16.mxu0 0
  %674 = vmatpush1.bf16.msra.mxu0 0
  %675 = vmatprep.subr.bf16.mxu0 0
  %676 = vmatpush1.bf16.msra.mxu0 0
  %677 = vmatprep.subr.bf16.mxu0 0
  %678 = vmatpush1.bf16.msra.mxu0 0
  %679 = vmatprep.subr.bf16.mxu0 0
  %680 = vmatpush1.bf16.msra.mxu0 0
  %681 = vmatprep.mubr.bf16.mxu0 0
  %682 = vmatmul.mubr.bf16.gmra.mrb[0].mxu0 %v647
  %v683 = vpop.f32.mrb[0].mxu0
  %v684 = vadd.f32 0.0, %v683
  %v685 = vpop.f32.mrb[0].mxu0
  %v686 = vpop.f32.mrb[0].mxu0
  %v687 = vpop.f32.mrb[0].mxu0
  %688 = vdwg.mxu0
  %v689 = vadd.f32 %v150, %v684
  %v690 = vxor.u32 %v689, 2147483648
  %v691 = vmul.f32 %v690, 1.442695
  %v692 = vpow.pop %v691
  %v693 = vadd.f32 %v692, 1.0
  %v694 = vrcp.pop %v693
  %v695 = vmul.f32 1.0, %v694
  %v696 = vtanh.pop %v689
  %v697 = vmul.f32 %v695, %v629
  %699 = vrot.lane.b32.xlu0 %v696, 64
  %v700 = vpop.permute.xlu0 %699
  %v702 = vmul.f32 %v695, %v700
  %704 = vrot.lane.b32.xlu0 %v702, 32
  %v705 = vpop.permute.xlu0 %704
  %v707 = vadd.f32 %v697, %v705
  %v708 = vtanh.pop %v707
  %710 = vrot.lane.b32.xlu0 %v708, 64
  %v711 = vpop.permute.xlu0 %710
  %v713 = vmul.f32 %v695, %v711
  %715 = vrot.lane.b32.xlu0 %v713, 32
  %v716 = vpop.permute.xlu0 %715
  %s718 = scalar_lea.vmem %s4, 48
  %719 = vst.msk [vmem:[%s718] sm:$0xff] %vm78, %v716
  %v720 = vpack.c.bf16 %v713, %v713
  %722 = vrot.lane.b32.xlu0 %v720, 32
  %v723 = vpop.permute.xlu0 %722
  %v725 = vsel %vm78, %v723, 0
  %727 = vmatprep.subr.bf16.mxu0 0
  %728 = vmatpush1.bf16.msra.mxu0 %v171
  %729 = vmatprep.subr.bf16.mxu0 0
  %730 = vmatpush1.bf16.msra.mxu0 %v172
  %731 = vmatprep.subr.bf16.mxu0 0
  %732 = vmatpush1.bf16.msra.mxu0 0
  %733 = vmatprep.subr.bf16.mxu0 0
  %734 = vmatpush1.bf16.msra.mxu0 0
  %735 = vmatprep.subr.bf16.mxu0 0
  %736 = vmatpush1.bf16.msra.mxu0 0
  %737 = vmatprep.subr.bf16.mxu0 0
  %738 = vmatpush1.bf16.msra.mxu0 0
  %739 = vmatprep.subr.bf16.mxu0 0
  %740 = vmatpush1.bf16.msra.mxu0 0
  %741 = vmatprep.subr.bf16.mxu0 0
  %742 = vmatpush1.bf16.msra.mxu0 0
  %743 = vmatprep.subr.bf16.mxu0 0
  %744 = vmatpush1.bf16.msra.mxu0 0
  %745 = vmatprep.subr.bf16.mxu0 0
  %746 = vmatpush1.bf16.msra.mxu0 0
  %747 = vmatprep.subr.bf16.mxu0 0
  %748 = vmatpush1.bf16.msra.mxu0 0
  %749 = vmatprep.subr.bf16.mxu0 0
  %750 = vmatpush1.bf16.msra.mxu0 0
  %751 = vmatprep.subr.bf16.mxu0 0
  %752 = vmatpush1.bf16.msra.mxu0 0
  %753 = vmatprep.subr.bf16.mxu0 0
  %754 = vmatpush1.bf16.msra.mxu0 0
  %755 = vmatprep.subr.bf16.mxu0 0
  %756 = vmatpush1.bf16.msra.mxu0 0
  %757 = vmatprep.subr.bf16.mxu0 0
  %758 = vmatpush1.bf16.msra.mxu0 0
  %759 = vmatprep.mubr.bf16.mxu0 0
  %760 = vmatmul.mubr.bf16.gmra.mrb[0].mxu0 %v725
  %v761 = vpop.f32.mrb[0].mxu0
  %v762 = vadd.f32 0.0, %v761
  %v763 = vpop.f32.mrb[0].mxu0
  %v764 = vpop.f32.mrb[0].mxu0
  %v765 = vpop.f32.mrb[0].mxu0
  %766 = vdwg.mxu0
  %v767 = vadd.f32 %v153, %v762
  %v768 = vxor.u32 %v767, 2147483648
  %v769 = vmul.f32 %v768, 1.442695
  %v770 = vpow.pop %v769
  %v771 = vadd.f32 %v770, 1.0
  %v772 = vrcp.pop %v771
  %v773 = vmul.f32 1.0, %v772
  %v774 = vtanh.pop %v767
  %v775 = vmul.f32 %v773, %v707
  %777 = vrot.lane.b32.xlu0 %v774, 64
  %v778 = vpop.permute.xlu0 %777
  %v780 = vmul.f32 %v773, %v778
  %782 = vrot.lane.b32.xlu0 %v780, 32
  %v783 = vpop.permute.xlu0 %782
  %v785 = vadd.f32 %v775, %v783
  %v786 = vtanh.pop %v785
  %788 = vrot.lane.b32.xlu0 %v786, 64
  %v789 = vpop.permute.xlu0 %788
  %v791 = vmul.f32 %v773, %v789
  %793 = vrot.lane.b32.xlu0 %v791, 32
  %v794 = vpop.permute.xlu0 %793
  %s796 = scalar_lea.vmem %s4, 56
  %797 = vst.msk [vmem:[%s796] sm:$0xff] %vm78, %v794
  %798 = vst.msk [vmem:[#allocation2] sm:$0xff] %vm78, %v794
  %800 = vrot.lane.b32.xlu0 %v785, 96
  %v801 = vpop.permute.xlu0 %800
  %803 = vst.msk [vmem:[#allocation3] sm:$0xff] %vm78, %v801
  %804 = vst.msk [vmem:[%s5] sm:$0xff] %vm78, %v801
  // Predicated region
  $region22: #{lstm_forward.1} parent=0 // pred_check
    _
  $region23: #{lstm_forward.1} parent=0 // pred_check_branch
    %806 = sbr.rel (0) target = $region25
  $region24: #{lstm_forward.1} parent=0 // pred_region
    _
  $region25: #{lstm_forward.1} parent=0 // pred_fallthru
    _
  // Predicated region
  $region26: #{lstm_forward.1} parent=0 // pred_check
    _
  $region27: #{lstm_forward.1} parent=0 // pred_check_branch
    %808 = sbr.rel (0) target = $region29
  $region28: #{lstm_forward.1} parent=0 // pred_region
    _
  $region29: #{lstm_forward.1} parent=0 // pred_fallthru
    _
  // Predicated region
  $region30: #{lstm_forward.1} parent=0 // pred_check
    _
  $region31: #{lstm_forward.1} parent=0 // pred_check_branch
    %810 = sbr.rel (0) target = $region33
  $region32: #{lstm_forward.1} parent=0 // pred_region
    _
  $region33: #{lstm_forward.1} parent=0 // pred_fallthru
    _
  // Predicated region
  $region34: #{lstm_forward.1} parent=0 // pred_check
    _
  $region35: #{lstm_forward.1} parent=0 // pred_check_branch
    %812 = sbr.rel (0) target = $region37
  $region36: #{lstm_forward.1} parent=0 // pred_region
    _
  $region37: #{lstm_forward.1} parent=0 // pred_fallthru
    _

</llo_original>
